<compile_context>
chip_gen: v7x
topology: tpu7x:2x2x1
jax: 0.10.0
libtpu: 0.0.40
codegen_flags: <defaults>
</compile_context>

<pallas_src>
import jax
import jax.numpy as jnp
from jax.experimental import pallas as pl
from jax.experimental.pallas import tpu as pltpu

EPS = 1e-5  # nn.LayerNorm default eps


def pixel_expanding_kernel(x_ref, wt_ref, g_ref, b_ref, o_ref):
    # x_ref : (1, Cin, tn)   activation block, spatial axis in lanes
    # wt_ref: (4*D, Cin)     conv weight (resident, tiny)
    # g_ref : (D, 1)  b_ref: (D, 1)   LayerNorm affine params (f32, lane-broadcast)
    # o_ref : (1, 4*D, tn)   conv + LN + ReLU result, spatial axis in lanes
    D = g_ref.shape[0]
    x = x_ref[0]                                                    # (Cin, tn)
    # single fused MXU call, f32 accumulation
    y = jnp.dot(wt_ref[...], x, preferred_element_type=jnp.float32)  # (4D, tn)
    gamma = g_ref[...].astype(jnp.float32)                          # (D, 1)
    beta = b_ref[...].astype(jnp.float32)                           # (D, 1)
    inv_d = 1.0 / D
    for grp in range(4):                     # static unroll; grp = p1 * 2 + p2
        yg = y[grp * D:(grp + 1) * D, :]     # (D, tn) static 8-aligned sublane slice
        mu = jnp.sum(yg, axis=0, keepdims=True) * inv_d             # (1, tn)
        ms = jnp.sum(yg * yg, axis=0, keepdims=True) * inv_d        # one-pass E[y^2]
        var = ms - mu * mu
        yn = (yg - mu) * jax.lax.rsqrt(var + EPS)                   # LayerNorm over D
        yn = yn * gamma + beta                                      # lane-broadcast affine
        # write each group straight into its output sublane slice (lane-dense store)
        o_ref[0, grp * D:(grp + 1) * D, :] = jnp.maximum(yn, 0.0).astype(o_ref.dtype)


def pixel_expanding(x_nchw, w, gamma, beta, *, tn=512):
    """x_nchw: (B, C_in, H, W); w: (4*D, C_in) (Conv2d 1x1 weight, squeezed);
    gamma/beta: (D,). Returns (B, D, 2H, 2W), matching the PyTorch forward.
    bf16 x/w accepted (f32 accumulation + f32 LayerNorm happen inside the kernel)."""
    B, Cin, H, W = x_nchw.shape
    D = gamma.shape[-1]
    assert w.shape == (4 * D, Cin), w.shape
    HW = H * W

    # NCHW consumed directly (no input transpose); spatial axis goes to lanes.
    x_flat = x_nchw.reshape(B, Cin, HW)

    # lane-dense spatial tile: multiple of 128, capped by padded HW; ragged tail
    # handled by zero-pad + slice (no hard divisibility assert).
    tn = max(128, (tn // 128) * 128)
    tn_eff = min(tn, ((HW + 127) // 128) * 128)
    HWp = pl.cdiv(HW, tn_eff) * tn_eff
    if HWp != HW:
        x_flat = jnp.pad(x_flat, ((0, 0), (0, 0), (0, HWp - HW)))
    grid = (B, HWp // tn_eff)

    out = pl.pallas_call(
        pixel_expanding_kernel,
        out_shape=jax.ShapeDtypeStruct((B, 4 * D, HWp), x_flat.dtype),
        grid_spec=pltpu.PrefetchScalarGridSpec(
            num_scalar_prefetch=0,
            grid=grid,
            in_specs=[
                pl.BlockSpec((1, Cin, tn_eff), lambda b, j: (b, 0, j)),  # activations
                pl.BlockSpec((4 * D, Cin), lambda b, j: (0, 0)),         # weight, resident
                pl.BlockSpec((D, 1), lambda b, j: (0, 0)),               # LN gamma
                pl.BlockSpec((D, 1), lambda b, j: (0, 0)),               # LN beta
            ],
            out_specs=pl.BlockSpec((1, 4 * D, tn_eff), lambda b, j: (b, 0, j)),
        ),
        compiler_params=pltpu.CompilerParams(
            # both axes independent -> megacore sharding on v7x's 2 TensorCores
            dimension_semantics=("parallel", "parallel")),
    )(x_flat, w,
      gamma.reshape(D, 1).astype(jnp.float32),
      beta.reshape(D, 1).astype(jnp.float32))

    # kernel output == conv+LN+ReLU result in NCHW: (B, 4D, H, W), channel = (p1, p2, c).
    # Single remaining data-movement pass: pixel-shuffle interleave into (B, D, 2H, 2W).
    y = out[:, :, :HW].reshape(B, 2, 2, D, H, W)          # (b, p1, p2, c, h, w)
    y = jnp.transpose(y, (0, 3, 4, 1, 5, 2))              # (b, c, h, p1, w, p2)
    return y.reshape(B, D, 2 * H, 2 * W)


def reference(x_nchw, w, gamma, beta):
    """Pure-JAX reference matching the PyTorch forward exactly (w is (4D, Cin))."""
    B, Cin, H, W = x_nchw.shape
    D = gamma.shape[-1]
    y = jnp.einsum('bchw,dc->bdhw', x_nchw, w)            # 1x1 conv, no bias
    y = y.reshape(B, 2, 2, D, H, W)                       # channel -> (p1, p2, c)
    y = jnp.transpose(y, (0, 4, 1, 5, 2, 3)).reshape(B, 2 * H, 2 * W, D)
    mu = y.mean(-1, keepdims=True)
    var = ((y - mu) ** 2).mean(-1, keepdims=True)
    y = (y - mu) / jnp.sqrt(var + EPS) * gamma + beta
    y = jnp.transpose(y, (0, 3, 1, 2))
    return jnp.maximum(y, 0.0)


if __name__ == "__main__":
    key = jax.random.PRNGKey(0)
    k_x, k_w, k_g, k_b = jax.random.split(key, 4)

    B, Cin, H, W = 2, 8, 16, 16    # input x: (B, in_dim, H, W)
    D = 16                         # out_dim

    x = jax.random.normal(k_x, (B, Cin, H, W), jnp.float32)
    # Conv2d(in_dim, 4*out_dim, 1, bias=False) weight, stored as (4*D, C_in)
    w = 0.1 * jax.random.normal(k_w, (4 * D, Cin), jnp.float32)
    gamma = 1.0 + 0.1 * jax.random.normal(k_g, (D,), jnp.float32)
    beta = 0.05 * jax.random.normal(k_b, (D,), jnp.float32)

    ref = reference(x, w, gamma, beta)

    # 1) f32 path, default tile (tn_eff = 256 here -> grid (2, 1)).
    out_f32 = jax.block_until_ready(pixel_expanding(x, w, gamma, beta))
    assert out_f32.shape == (B, D, 2 * H, 2 * W), out_f32.shape
    assert jnp.allclose(out_f32, ref, atol=5e-4, rtol=5e-4), \
        float(jnp.abs(out_f32 - ref).max())

    # 2) f32 path with tn=128 -> grid (2, 2): exercises multiple spatial tiles.
    out_t128 = jax.block_until_ready(pixel_expanding(x, w, gamma, beta, tn=128))
    assert jnp.allclose(out_t128, ref, atol=5e-4, rtol=5e-4), \
        float(jnp.abs(out_t128 - ref).max())

    # 3) bf16 I/O fast path (memory-bound win). Compare against the reference evaluated
    #    on the same bf16-rounded inputs so only accumulation order / bf16 output
    #    rounding remain as differences.
    xb, wb = x.astype(jnp.bfloat16), w.astype(jnp.bfloat16)
    out_bf16 = jax.block_until_ready(pixel_expanding(xb, wb, gamma, beta, tn=128))
    ref_b = reference(xb.astype(jnp.float32), wb.astype(jnp.float32), gamma, beta)
    assert jnp.allclose(out_bf16.astype(jnp.float32), ref_b, atol=2e-2, rtol=2e-2), \
        float(jnp.abs(out_bf16.astype(jnp.float32) - ref_b).max())

    print("KERNEL_OK")
</pallas_src>

<mosaic_0001>
module attributes {stable_mosaic.version = 11 : i64} {
  func.func @pixel_expanding_kernel(%arg0: i32, %arg1: i32, %arg2: memref<1x8x256xf32, #tpu.memory_space<vmem>>, %arg3: memref<64x8xf32, #tpu.memory_space<vmem>>, %arg4: memref<16x1xf32, #tpu.memory_space<vmem>>, %arg5: memref<16x1xf32, #tpu.memory_space<vmem>>, %arg6: memref<1x64x256xf32, #tpu.memory_space<vmem>>) attributes {dimension_semantics = [#tpu.dimension_semantics<parallel>, #tpu.dimension_semantics<parallel>], iteration_bounds = array<i64: 2, 1>, scalar_prefetch = 0 : i64, scratch_operands = 0 : i64, tpu.core_type = #tpu.core_type<tc>, window_params = [{transform_indices = @transform_0, window_bounds = array<i64: 1, 8, 256>}, {pipeline_mode = #tpu.pipeline_mode<synchronous>, transform_indices = @transform_1, window_bounds = array<i64: 64, 8>}, {pipeline_mode = #tpu.pipeline_mode<synchronous>, transform_indices = @transform_2, window_bounds = array<i64: 16, 1>}, {pipeline_mode = #tpu.pipeline_mode<synchronous>, transform_indices = @transform_3, window_bounds = array<i64: 16, 1>}, {transform_indices = @transform_4, window_bounds = array<i64: 1, 64, 256>}]} {
    %c0 = arith.constant 0 : index
    %c0_0 = arith.constant 0 : index
    %c0_1 = arith.constant 0 : index
    %0 = vector.load %arg2[%c0, %c0_0, %c0_1] : memref<1x8x256xf32, #tpu.memory_space<vmem>>, vector<1x8x256xf32>
    %1 = vector.shape_cast %0 : vector<1x8x256xf32> to vector<8x256xf32>
    %c0_2 = arith.constant 0 : index
    %c0_3 = arith.constant 0 : index
    %2 = vector.load %arg3[%c0_2, %c0_3] : memref<64x8xf32, #tpu.memory_space<vmem>>, vector<64x8xf32>
    %cst = arith.constant dense<0.000000e+00> : vector<64x256xf32>
    %3 = tpu.matmul %2, %1, %cst {dimension_numbers = #tpu.dot_dimension_numbers<[1], [0], [0], [1], [0, 0, 1, 1], [], []>} : vector<64x8xf32>, vector<8x256xf32>, vector<64x256xf32> -> vector<64x256xf32>
    %c0_4 = arith.constant 0 : index
    %c0_5 = arith.constant 0 : index
    %4 = vector.load %arg4[%c0_4, %c0_5] : memref<16x1xf32, #tpu.memory_space<vmem>>, vector<16x1xf32>
    %c0_6 = arith.constant 0 : index
    %c0_7 = arith.constant 0 : index
    %5 = vector.load %arg5[%c0_6, %c0_7] : memref<16x1xf32, #tpu.memory_space<vmem>>, vector<16x1xf32>
    %6 = vector.extract_strided_slice %3 {offsets = [0, 0], sizes = [16, 256], strides = [1, 1]} : vector<64x256xf32> to vector<16x256xf32>
    %cst_8 = arith.constant dense<0.000000e+00> : vector<256xf32>
    %7 = vector.multi_reduction <add>, %6, %cst_8 [0] : vector<16x256xf32> to vector<256xf32>
    %8 = vector.shape_cast %7 : vector<256xf32> to vector<1x256xf32>
    %cst_9 = arith.constant 6.250000e-02 : f32
    %9 = vector.broadcast %cst_9 : f32 to vector<1x256xf32>
    %10 = arith.mulf %8, %9 : vector<1x256xf32>
    %11 = arith.mulf %6, %6 : vector<16x256xf32>
    %cst_10 = arith.constant dense<0.000000e+00> : vector<256xf32>
    %12 = vector.multi_reduction <add>, %11, %cst_10 [0] : vector<16x256xf32> to vector<256xf32>
    %13 = vector.shape_cast %12 : vector<256xf32> to vector<1x256xf32>
    %cst_11 = arith.constant 6.250000e-02 : f32
    %14 = vector.broadcast %cst_11 : f32 to vector<1x256xf32>
    %15 = arith.mulf %13, %14 : vector<1x256xf32>
    %16 = arith.mulf %10, %10 : vector<1x256xf32>
    %17 = arith.subf %15, %16 : vector<1x256xf32>
    %18 = vector.broadcast %10 : vector<1x256xf32> to vector<16x256xf32>
    %19 = arith.subf %6, %18 : vector<16x256xf32>
    %cst_12 = arith.constant 9.99999974E-6 : f32
    %20 = vector.broadcast %cst_12 : f32 to vector<1x256xf32>
    %21 = arith.addf %17, %20 : vector<1x256xf32>
    %22 = math.rsqrt %21 : vector<1x256xf32>
    %23 = vector.broadcast %22 : vector<1x256xf32> to vector<16x256xf32>
    %24 = arith.mulf %19, %23 : vector<16x256xf32>
    %25 = vector.broadcast %4 : vector<16x1xf32> to vector<16x256xf32>
    %26 = arith.mulf %24, %25 : vector<16x256xf32>
    %27 = vector.broadcast %5 : vector<16x1xf32> to vector<16x256xf32>
    %28 = arith.addf %26, %27 : vector<16x256xf32>
    %cst_13 = arith.constant 0.000000e+00 : f32
    %29 = vector.broadcast %cst_13 : f32 to vector<16x256xf32>
    %30 = arith.maximumf %28, %29 : vector<16x256xf32>
    %c0_14 = arith.constant 0 : index
    %c0_15 = arith.constant 0 : index
    %c0_16 = arith.constant 0 : index
    %31 = vector.load %arg6[%c0_14, %c0_15, %c0_16] : memref<1x64x256xf32, #tpu.memory_space<vmem>>, vector<1x16x256xf32>
    %32 = vector.shape_cast %31 : vector<1x16x256xf32> to vector<16x256xf32>
    %33 = vector.shape_cast %30 : vector<16x256xf32> to vector<1x16x256xf32>
    tpu.vector_store %arg6[%c0_14, %c0_15, %c0_16], %33 {strides = array<i32>} : memref<1x64x256xf32, #tpu.memory_space<vmem>>, vector<1x16x256xf32>,
    %34 = vector.extract_strided_slice %3 {offsets = [16, 0], sizes = [16, 256], strides = [1, 1]} : vector<64x256xf32> to vector<16x256xf32>
    %cst_17 = arith.constant dense<0.000000e+00> : vector<256xf32>
    %35 = vector.multi_reduction <add>, %34, %cst_17 [0] : vector<16x256xf32> to vector<256xf32>
    %36 = vector.shape_cast %35 : vector<256xf32> to vector<1x256xf32>
    %cst_18 = arith.constant 6.250000e-02 : f32
    %37 = vector.broadcast %cst_18 : f32 to vector<1x256xf32>
    %38 = arith.mulf %36, %37 : vector<1x256xf32>
    %39 = arith.mulf %34, %34 : vector<16x256xf32>
    %cst_19 = arith.constant dense<0.000000e+00> : vector<256xf32>
    %40 = vector.multi_reduction <add>, %39, %cst_19 [0] : vector<16x256xf32> to vector<256xf32>
    %41 = vector.shape_cast %40 : vector<256xf32> to vector<1x256xf32>
    %cst_20 = arith.constant 6.250000e-02 : f32
    %42 = vector.broadcast %cst_20 : f32 to vector<1x256xf32>
    %43 = arith.mulf %41, %42 : vector<1x256xf32>
    %44 = arith.mulf %38, %38 : vector<1x256xf32>
    %45 = arith.subf %43, %44 : vector<1x256xf32>
    %46 = vector.broadcast %38 : vector<1x256xf32> to vector<16x256xf32>
    %47 = arith.subf %34, %46 : vector<16x256xf32>
    %cst_21 = arith.constant 9.99999974E-6 : f32
    %48 = vector.broadcast %cst_21 : f32 to vector<1x256xf32>
    %49 = arith.addf %45, %48 : vector<1x256xf32>
    %50 = math.rsqrt %49 : vector<1x256xf32>
    %51 = vector.broadcast %50 : vector<1x256xf32> to vector<16x256xf32>
    %52 = arith.mulf %47, %51 : vector<16x256xf32>
    %53 = vector.broadcast %4 : vector<16x1xf32> to vector<16x256xf32>
    %54 = arith.mulf %52, %53 : vector<16x256xf32>
    %55 = vector.broadcast %5 : vector<16x1xf32> to vector<16x256xf32>
    %56 = arith.addf %54, %55 : vector<16x256xf32>
    %cst_22 = arith.constant 0.000000e+00 : f32
    %57 = vector.broadcast %cst_22 : f32 to vector<16x256xf32>
    %58 = arith.maximumf %56, %57 : vector<16x256xf32>
    %c0_23 = arith.constant 0 : index
    %c16 = arith.constant 16 : index
    %c0_24 = arith.constant 0 : index
    %59 = vector.load %arg6[%c0_23, %c16, %c0_24] : memref<1x64x256xf32, #tpu.memory_space<vmem>>, vector<1x16x256xf32>
    %60 = vector.shape_cast %59 : vector<1x16x256xf32> to vector<16x256xf32>
    %61 = vector.shape_cast %58 : vector<16x256xf32> to vector<1x16x256xf32>
    tpu.vector_store %arg6[%c0_23, %c16, %c0_24], %61 {strides = array<i32>} : memref<1x64x256xf32, #tpu.memory_space<vmem>>, vector<1x16x256xf32>,
    %62 = vector.extract_strided_slice %3 {offsets = [32, 0], sizes = [16, 256], strides = [1, 1]} : vector<64x256xf32> to vector<16x256xf32>
    %cst_25 = arith.constant dense<0.000000e+00> : vector<256xf32>
    %63 = vector.multi_reduction <add>, %62, %cst_25 [0] : vector<16x256xf32> to vector<256xf32>
    %64 = vector.shape_cast %63 : vector<256xf32> to vector<1x256xf32>
    %cst_26 = arith.constant 6.250000e-02 : f32
    %65 = vector.broadcast %cst_26 : f32 to vector<1x256xf32>
    %66 = arith.mulf %64, %65 : vector<1x256xf32>
    %67 = arith.mulf %62, %62 : vector<16x256xf32>
    %cst_27 = arith.constant dense<0.000000e+00> : vector<256xf32>
    %68 = vector.multi_reduction <add>, %67, %cst_27 [0] : vector<16x256xf32> to vector<256xf32>
    %69 = vector.shape_cast %68 : vector<256xf32> to vector<1x256xf32>
    %cst_28 = arith.constant 6.250000e-02 : f32
    %70 = vector.broadcast %cst_28 : f32 to vector<1x256xf32>
    %71 = arith.mulf %69, %70 : vector<1x256xf32>
    %72 = arith.mulf %66, %66 : vector<1x256xf32>
    %73 = arith.subf %71, %72 : vector<1x256xf32>
    %74 = vector.broadcast %66 : vector<1x256xf32> to vector<16x256xf32>
    %75 = arith.subf %62, %74 : vector<16x256xf32>
    %cst_29 = arith.constant 9.99999974E-6 : f32
    %76 = vector.broadcast %cst_29 : f32 to vector<1x256xf32>
    %77 = arith.addf %73, %76 : vector<1x256xf32>
    %78 = math.rsqrt %77 : vector<1x256xf32>
    %79 = vector.broadcast %78 : vector<1x256xf32> to vector<16x256xf32>
    %80 = arith.mulf %75, %79 : vector<16x256xf32>
    %81 = vector.broadcast %4 : vector<16x1xf32> to vector<16x256xf32>
    %82 = arith.mulf %80, %81 : vector<16x256xf32>
    %83 = vector.broadcast %5 : vector<16x1xf32> to vector<16x256xf32>
    %84 = arith.addf %82, %83 : vector<16x256xf32>
    %cst_30 = arith.constant 0.000000e+00 : f32
    %85 = vector.broadcast %cst_30 : f32 to vector<16x256xf32>
    %86 = arith.maximumf %84, %85 : vector<16x256xf32>
    %c0_31 = arith.constant 0 : index
    %c32 = arith.constant 32 : index
    %c0_32 = arith.constant 0 : index
    %87 = vector.load %arg6[%c0_31, %c32, %c0_32] : memref<1x64x256xf32, #tpu.memory_space<vmem>>, vector<1x16x256xf32>
    %88 = vector.shape_cast %87 : vector<1x16x256xf32> to vector<16x256xf32>
    %89 = vector.shape_cast %86 : vector<16x256xf32> to vector<1x16x256xf32>
    tpu.vector_store %arg6[%c0_31, %c32, %c0_32], %89 {strides = array<i32>} : memref<1x64x256xf32, #tpu.memory_space<vmem>>, vector<1x16x256xf32>,
    %90 = vector.extract_strided_slice %3 {offsets = [48, 0], sizes = [16, 256], strides = [1, 1]} : vector<64x256xf32> to vector<16x256xf32>
    %cst_33 = arith.constant dense<0.000000e+00> : vector<256xf32>
    %91 = vector.multi_reduction <add>, %90, %cst_33 [0] : vector<16x256xf32> to vector<256xf32>
    %92 = vector.shape_cast %91 : vector<256xf32> to vector<1x256xf32>
    %cst_34 = arith.constant 6.250000e-02 : f32
    %93 = vector.broadcast %cst_34 : f32 to vector<1x256xf32>
    %94 = arith.mulf %92, %93 : vector<1x256xf32>
    %95 = arith.mulf %90, %90 : vector<16x256xf32>
    %cst_35 = arith.constant dense<0.000000e+00> : vector<256xf32>
    %96 = vector.multi_reduction <add>, %95, %cst_35 [0] : vector<16x256xf32> to vector<256xf32>
    %97 = vector.shape_cast %96 : vector<256xf32> to vector<1x256xf32>
    %cst_36 = arith.constant 6.250000e-02 : f32
    %98 = vector.broadcast %cst_36 : f32 to vector<1x256xf32>
    %99 = arith.mulf %97, %98 : vector<1x256xf32>
    %100 = arith.mulf %94, %94 : vector<1x256xf32>
    %101 = arith.subf %99, %100 : vector<1x256xf32>
    %102 = vector.broadcast %94 : vector<1x256xf32> to vector<16x256xf32>
    %103 = arith.subf %90, %102 : vector<16x256xf32>
    %cst_37 = arith.constant 9.99999974E-6 : f32
    %104 = vector.broadcast %cst_37 : f32 to vector<1x256xf32>
    %105 = arith.addf %101, %104 : vector<1x256xf32>
    %106 = math.rsqrt %105 : vector<1x256xf32>
    %107 = vector.broadcast %106 : vector<1x256xf32> to vector<16x256xf32>
    %108 = arith.mulf %103, %107 : vector<16x256xf32>
    %109 = vector.broadcast %4 : vector<16x1xf32> to vector<16x256xf32>
    %110 = arith.mulf %108, %109 : vector<16x256xf32>
    %111 = vector.broadcast %5 : vector<16x1xf32> to vector<16x256xf32>
    %112 = arith.addf %110, %111 : vector<16x256xf32>
    %cst_38 = arith.constant 0.000000e+00 : f32
    %113 = vector.broadcast %cst_38 : f32 to vector<16x256xf32>
    %114 = arith.maximumf %112, %113 : vector<16x256xf32>
    %c0_39 = arith.constant 0 : index
    %c48 = arith.constant 48 : index
    %c0_40 = arith.constant 0 : index
    %115 = vector.load %arg6[%c0_39, %c48, %c0_40] : memref<1x64x256xf32, #tpu.memory_space<vmem>>, vector<1x16x256xf32>
    %116 = vector.shape_cast %115 : vector<1x16x256xf32> to vector<16x256xf32>
    %117 = vector.shape_cast %114 : vector<16x256xf32> to vector<1x16x256xf32>
    tpu.vector_store %arg6[%c0_39, %c48, %c0_40], %117 {strides = array<i32>} : memref<1x64x256xf32, #tpu.memory_space<vmem>>, vector<1x16x256xf32>,
    return
  }
  func.func @transform_0(%arg0: i32, %arg1: i32) -> (i32, i32, i32) {
    %c0_i32 = arith.constant 0 : i32
    %c0_i32_0 = arith.constant 0 : i32
    return %arg0, %c0_i32, %arg1 : i32, i32, i32
  }
  func.func @transform_1(%arg0: i32, %arg1: i32) -> (i32, i32) {
    %c0_i32 = arith.constant 0 : i32
    %c0_i32_0 = arith.constant 0 : i32
    %c0_i32_1 = arith.constant 0 : i32
    return %c0_i32, %c0_i32_0 : i32, i32
  }
  func.func @transform_2(%arg0: i32, %arg1: i32) -> (i32, i32) {
    %c0_i32 = arith.constant 0 : i32
    %c0_i32_0 = arith.constant 0 : i32
    %c0_i32_1 = arith.constant 0 : i32
    return %c0_i32, %c0_i32_0 : i32, i32
  }
  func.func @transform_3(%arg0: i32, %arg1: i32) -> (i32, i32) {
    %c0_i32 = arith.constant 0 : i32
    %c0_i32_0 = arith.constant 0 : i32
    %c0_i32_1 = arith.constant 0 : i32
    return %c0_i32, %c0_i32_0 : i32, i32
  }
  func.func @transform_4(%arg0: i32, %arg1: i32) -> (i32, i32, i32) {
    %c0_i32 = arith.constant 0 : i32
    %c0_i32_0 = arith.constant 0 : i32
    return %arg0, %c0_i32, %arg1 : i32, i32, i32
  }
}

</mosaic_0001>

<llo_original>
// kernel: tpu_custom_call.1
$region0: #{tpu_custom_call.1}
  #allocation0 [shape = 'u32[]', space=smem, size = 0x4, offset = 0x4, fixed_abs, tag = 'smem constant byte address 0x4 - core index']
  #allocation1 [shape = 'u32[144,128]{1,0:T(1,128)}', space=vmem, size = 0x12000, scoped, tag = 'internal scratch']
  %s0 = inlined_call_operand.vmem [shape: f32[2,8,256], index: 0, kind: input, shape index: {}]
  %s1 = inlined_call_operand.vmem [shape: f32[64,8], index: 1, kind: input, shape index: {}]
  %s2 = inlined_call_operand.vmem [shape: f32[16,1], index: 2, kind: input, shape index: {}]
  %s3 = inlined_call_operand.vmem [shape: f32[16,1], index: 3, kind: input, shape index: {}]
  %s4 = inlined_call_operand.hbm [shape: f32[2,64,256], index: 4, kind: output, shape index: {}]
  %s5 = sld [smem:[#allocation0]]
  $region49: #{tpu_custom_call.1} parent=0
    _
  %s7 = ssub.s32 1, %s5
  %s8 = scalar_select 0, %s7, %s5
  $region1: #{tpu_custom_call.1} parent=0
    #allocation2 [shape = 'u8[131072]{0}', space=vmem, size = 0x20000, scoped, tag = 'output window, operand 0']
    #allocation3 [shape = 's32[2]{0}', space=sflag, size = 0x8, scoped, tag = 'scoped memory for tpu_custom_call.1']
    %9 = vsyncpa [#allocation3], 0
    %s10 = scalar_lea.sflag [#allocation3], 1
    %11 = vsyncpa %s10, 0
    loop: start=0, step=1, limit=4
    $region2: #{tpu_custom_call.1} parent=1 // loop_pre_header
      _
    $region3: #{tpu_custom_call.1} parent=1 // loop_header
      %s13 = sphi 0, %s17
      %p14 = scmp.ge.s32.totalorder %s13, 4
      %s20 = sphi 0, %s32
      %s21 = sphi 0, %s28
      %s22 = sphi 0, %s20
      %s23 = sphi 0, %s21
      %s24 = sphi 0, %s22
      %s25 = sphi 0, %s23
      %s37 = sphi 0, %s39
      %s40 = sphi 0, %s37
      %s41 = sphi 0, %s40
      %s57 = sphi 0, %s41
      %s61 = sphi 0, %s61
      %s63 = sphi 0, %s61
      %s64 = sphi 0, %s63
      %s78 = sphi 0, %s64
      %s82 = sphi 0, %s82
      %s84 = sphi 0, %s82
      %s85 = sphi 0, %s84
      %s99 = sphi 0, %s85
      %s103 = sphi 0, %s103
      %s105 = sphi 0, %s103
      %s106 = sphi 0, %s105
      %s120 = sphi 0, %s106
      %s128 = sphi 0, %s130
      %s131 = sphi 0, %s128
      %s132 = sphi 0, %s131
      %s148 = sphi 0, %s132
    $region4: #{tpu_custom_call.1} parent=1 // loop_header_branch
      %16 = sbr.rel (%p14) target = $region8
    $region5: #{tpu_custom_call.1} parent=1 // loop_body
      %s18 = ssub.s32 %s13, 1
      %s19 = ssub.s32 %s13, 2
      %s26 = sadd.s32 1, %s21
      %p27 = scmp.ge.s32.totalorder %s26, 1
      %s28 = scalar_select %p27, 0, %s26
      %s29 = sadd.s32 1, %s20
      %s30 = scalar_select %p27, %s29, %s20
      %p31 = scmp.ge.s32.totalorder %s30, 2
      %s32 = scalar_select %p31, 0, %s30
      %s33 = ssub.s32 %s20, %s32
      %s34 = ssub.s32 %s21, %s28
      %s35 = sor.u32 %s33, %s34
      %p36 = scmp.eq.s32.totalorder %s35, 0
      %s38 = sadd.s32 %s37, 1
      %s39 = scalar_select %p36, %s37, %s38
      %p42 = pneg %p36
      %p43 = scmp.eq.s32.totalorder %s13, 1
      %p44 = por %p42, %p43
      %p45 = scmp.ne.s32.totalorder %s37, %s40
      %p46 = scmp.eq.s32.totalorder %s13, 0
      %p47 = por %p45, %p46
      %p48 = scmp.ne.s32.totalorder %s37, %s40
      %p49 = scmp.eq.s32.totalorder %s18, 1
      %p50 = por %p48, %p49
      %p51 = scmp.ne.s32.totalorder %s40, %s41
      %p52 = scmp.eq.s32.totalorder %s18, 0
      %p53 = por %p51, %p52
      %p54 = scmp.ne.s32.totalorder %s40, %s41
      %p55 = scmp.eq.s32.totalorder %s19, 1
      %p56 = por %p54, %p55
      %p58 = scmp.ne.s32.totalorder %s41, %s57
      %p59 = scmp.eq.s32.totalorder %s19, 0
      %p60 = por %p58, %p59
      %s62 = sadd.s32 %s61, 1
      %p65 = scmp.eq.s32.totalorder %s13, 1
      %p66 = scmp.ne.s32.totalorder %s61, %s63
      %p67 = scmp.eq.s32.totalorder %s13, 0
      %p68 = por %p66, %p67
      %p69 = scmp.ne.s32.totalorder %s61, %s63
      %p70 = scmp.eq.s32.totalorder %s18, 1
      %p71 = por %p69, %p70
      %p72 = scmp.ne.s32.totalorder %s63, %s64
      %p73 = scmp.eq.s32.totalorder %s18, 0
      %p74 = por %p72, %p73
      %p75 = scmp.ne.s32.totalorder %s63, %s64
      %p76 = scmp.eq.s32.totalorder %s19, 1
      %p77 = por %p75, %p76
      %p79 = scmp.ne.s32.totalorder %s64, %s78
      %p80 = scmp.eq.s32.totalorder %s19, 0
      %p81 = por %p79, %p80
      %s83 = sadd.s32 %s82, 1
      %p86 = scmp.eq.s32.totalorder %s13, 1
      %p87 = scmp.ne.s32.totalorder %s82, %s84
      %p88 = scmp.eq.s32.totalorder %s13, 0
      %p89 = por %p87, %p88
      %p90 = scmp.ne.s32.totalorder %s82, %s84
      %p91 = scmp.eq.s32.totalorder %s18, 1
      %p92 = por %p90, %p91
      %p93 = scmp.ne.s32.totalorder %s84, %s85
      %p94 = scmp.eq.s32.totalorder %s18, 0
      %p95 = por %p93, %p94
      %p96 = scmp.ne.s32.totalorder %s84, %s85
      %p97 = scmp.eq.s32.totalorder %s19, 1
      %p98 = por %p96, %p97
      %p100 = scmp.ne.s32.totalorder %s85, %s99
      %p101 = scmp.eq.s32.totalorder %s19, 0
      %p102 = por %p100, %p101
      %s104 = sadd.s32 %s103, 1
      %p107 = scmp.eq.s32.totalorder %s13, 1
      %p108 = scmp.ne.s32.totalorder %s103, %s105
      %p109 = scmp.eq.s32.totalorder %s13, 0
      %p110 = por %p108, %p109
      %p111 = scmp.ne.s32.totalorder %s103, %s105
      %p112 = scmp.eq.s32.totalorder %s18, 1
      %p113 = por %p111, %p112
      %p114 = scmp.ne.s32.totalorder %s105, %s106
      %p115 = scmp.eq.s32.totalorder %s18, 0
      %p116 = por %p114, %p115
      %p117 = scmp.ne.s32.totalorder %s105, %s106
      %p118 = scmp.eq.s32.totalorder %s19, 1
      %p119 = por %p117, %p118
      %p121 = scmp.ne.s32.totalorder %s106, %s120
      %p122 = scmp.eq.s32.totalorder %s19, 0
      %p123 = por %p121, %p122
      %s124 = ssub.s32 %s20, %s32
      %s125 = ssub.s32 %s21, %s28
      %s126 = sor.u32 %s124, %s125
      %p127 = scmp.eq.s32.totalorder %s126, 0
      %s129 = sadd.s32 %s128, 1
      %s130 = scalar_select %p127, %s128, %s129
      %p133 = pneg %p127
      %p134 = scmp.eq.s32.totalorder %s13, 1
      %p135 = por %p133, %p134
      %p136 = scmp.ne.s32.totalorder %s128, %s131
      %p137 = scmp.eq.s32.totalorder %s13, 0
      %p138 = por %p136, %p137
      %p139 = scmp.ne.s32.totalorder %s128, %s131
      %p140 = scmp.eq.s32.totalorder %s18, 1
      %p141 = por %p139, %p140
      %p142 = scmp.ne.s32.totalorder %s131, %s132
      %p143 = scmp.eq.s32.totalorder %s18, 0
      %p144 = por %p142, %p143
      %p145 = scmp.ne.s32.totalorder %s131, %s132
      %p146 = scmp.eq.s32.totalorder %s19, 1
      %p147 = por %p145, %p146
      %p149 = scmp.ne.s32.totalorder %s132, %s148
      %p150 = scmp.eq.s32.totalorder %s19, 0
      %p151 = por %p149, %p150
      %p152 = scmp.le.s32.totalorder 1, %s13
      %p153 = scmp.lt.s32.totalorder %s13, 3
      %p154 = pnand %p152, %p153
      %p155 = pneg %p154
      // Predicated region
      $region9: #{tpu_custom_call.1} parent=5 // pred_check
        _
      $region10: #{tpu_custom_call.1} parent=5 // pred_check_branch
        %157 = sbr.rel (%p154) target = $region12
      $region11: #{tpu_custom_call.1} parent=5 // pred_region
        %s158 = ssub.s32 %s13, 1
        // Predicated region
        $region13: #{tpu_custom_call.1} parent=11 // pred_check
          %p159 = pneg %p74
        $region14: #{tpu_custom_call.1} parent=11 // pred_check_branch
          %161 = sbr.rel (%p159) target = $region16
        $region15: #{tpu_custom_call.1} parent=11 // pred_region
          _
        $region16: #{tpu_custom_call.1} parent=11 // pred_fallthru
          _
        // Predicated region
        $region17: #{tpu_custom_call.1} parent=11 // pred_check
          %p162 = pneg %p95
        $region18: #{tpu_custom_call.1} parent=11 // pred_check_branch
          %164 = sbr.rel (%p162) target = $region20
        $region19: #{tpu_custom_call.1} parent=11 // pred_region
          _
        $region20: #{tpu_custom_call.1} parent=11 // pred_fallthru
          _
        // Predicated region
        $region21: #{tpu_custom_call.1} parent=11 // pred_check
          %p165 = pneg %p116
        $region22: #{tpu_custom_call.1} parent=11 // pred_check_branch
          %167 = sbr.rel (%p165) target = $region24
        $region23: #{tpu_custom_call.1} parent=11 // pred_region
          _
        $region24: #{tpu_custom_call.1} parent=11 // pred_fallthru
          _
      $region12: #{tpu_custom_call.1} parent=5 // pred_fallthru
        _
      %p168 = scmp.lt.s32.totalorder %s13, 2
      // Predicated region
      $region25: #{tpu_custom_call.1} parent=5 // pred_check
        %p169 = pneg %p168
      $region26: #{tpu_custom_call.1} parent=5 // pred_check_branch
        %171 = sbr.rel (%p169) target = $region28
      $region27: #{tpu_custom_call.1} parent=5 // pred_region
        // Predicated region
        $region29: #{tpu_custom_call.1} parent=27 // pred_check
          %p172 = pneg %p47
        $region30: #{tpu_custom_call.1} parent=27 // pred_check_branch
          %174 = sbr.rel (%p172) target = $region32
        $region31: #{tpu_custom_call.1} parent=27 // pred_region
          %s175 = smul.u32 2, %s21
          %p176 = scmp.lt.s32.totalorder %s20, 1
          %s177 = scalar_select %p176, %s20, 1
          %p178 = scmp.lt.s32.totalorder %s175, 1
          %s179 = scalar_select %p178, %s175, 1
          %s180 = smul.addr %s177, 2
          %s181 = sadd.s32 %s179, %s180
          %s182 = smul.addr %s181, 8
          %s183 = scalar_lea.vmem %s0, %s182
          %s184 = smul.u32 2, %s21
        $region32: #{tpu_custom_call.1} parent=27 // pred_fallthru
          _
      $region28: #{tpu_custom_call.1} parent=5 // pred_fallthru
        _
      %p185 = scmp.le.s32.totalorder 1, %s13
      %p186 = scmp.lt.s32.totalorder %s13, 3
      %p187 = pnand %p185, %p186
      %p188 = pneg %p187
      // Predicated region
      $region33: #{tpu_custom_call.1} parent=5 // pred_check
        _
      $region34: #{tpu_custom_call.1} parent=5 // pred_check_branch
        %190 = sbr.rel (%p187) target = $region36
      $region35: #{tpu_custom_call.1} parent=5 // pred_region
        %s191 = ssub.s32 %s13, 1
        %s192 = smul.u32 2, %s23
        %p193 = scmp.lt.s32.totalorder %s22, 1
        %s194 = scalar_select %p193, %s22, 1
        %p195 = scmp.lt.s32.totalorder %s192, 1
        %s196 = scalar_select %p195, %s192, 1
        %s197 = smul.addr %s194, 2
        %s198 = sadd.s32 %s196, %s197
        %s199 = smul.addr %s198, 8
        %s200 = scalar_lea.vmem %s0, %s199
        %p201 = pneg %p53
        %p202 = pneg %p50
        %p203 = pneg %p74
        %p204 = pneg %p71
        %p205 = pneg %p95
        %p206 = pneg %p92
        %p207 = pneg %p116
        %p208 = pneg %p113
        %p209 = pneg %p144
        %p210 = pneg %p141
        %s211 = sand.u32 %s131, 1
        %s212 = scalar_lea.sflag [#allocation3], %s211
        %s213 = sand.u32 %s131, 1
        %s214 = smul.addr %s213, 128
        %s215 = scalar_lea.vmem [#allocation2], %s214
        %s216 = smul.u32 2, %s23
        %p217 = scmp.lt.s32.totalorder %s22, 1
        %s218 = scalar_select %p217, %s22, 1
        %p219 = scmp.lt.s32.totalorder %s216, 1
        %s220 = scalar_select %p219, %s216, 1
        %s221 = smul.addr %s218, 2
        %s222 = sadd.s32 %s220, %s221
        %s223 = smul.addr %s222, 8
        %s224 = scalar_lea.vmem %s0, %s223
        %s225 = smul.u32 2, %s23
        %s226 = smul.u32 2, %s23
        %v227 = vld [vmem:[%s224] sm:$0xff]
        %v228 = vld [vmem:[%s224 + $0x8] sm:$0xff]
        %v229 = vld [vmem:[%s1] sm:$0xff]
        %v230 = vld [vmem:[%s1 + $0x8] sm:$0xff]
        %v231 = vld [vmem:[%s1 + $0x10] sm:$0xff]
        %v232 = vld [vmem:[%s1 + $0x18] sm:$0xff]
        %v233 = vld [vmem:[%s1 + $0x20] sm:$0xff]
        %v234 = vld [vmem:[%s1 + $0x28] sm:$0xff]
        %v235 = vld [vmem:[%s1 + $0x30] sm:$0xff]
        %v236 = vld [vmem:[%s1 + $0x38] sm:$0xff]
        %vm237 = vcmask 64512
        %v239 = vsel %vm237, %v229, 0
        %v242 = vsel %vm237, %v230, 0
        %v245 = vsel %vm237, %v231, 0
        %v248 = vsel %vm237, %v232, 0
        %v251 = vsel %vm237, %v233, 0
        %v254 = vsel %vm237, %v234, 0
        %v257 = vsel %vm237, %v235, 0
        %v260 = vsel %vm237, %v236, 0
        %262 = vmatprep.subr.mxu0 %v228
        %263 = vmatpush1.msra.mxu0 %v227
        %264 = vmatprep.subr.mxu0 0.0
        %265 = vmatpush1.msra.mxu0 0.0
        %266 = vmatprep.subr.mxu0 0.0
        %267 = vmatpush1.msra.mxu0 0.0
        %268 = vmatprep.subr.mxu0 0.0
        %269 = vmatpush1.msra.mxu0 0.0
        %270 = vmatprep.subr.mxu0 0.0
        %271 = vmatpush1.msra.mxu0 0.0
        %272 = vmatprep.subr.mxu0 0.0
        %273 = vmatpush1.msra.mxu0 0.0
        %274 = vmatprep.subr.mxu0 0.0
        %275 = vmatpush1.msra.mxu0 0.0
        %276 = vmatprep.subr.mxu0 0.0
        %277 = vmatpush1.msra.mxu0 0.0
        %278 = vmatprep.subr.mxu0 0.0
        %279 = vmatpush1.msra.mxu0 0.0
        %280 = vmatprep.subr.mxu0 0.0
        %281 = vmatpush1.msra.mxu0 0.0
        %282 = vmatprep.subr.mxu0 0.0
        %283 = vmatpush1.msra.mxu0 0.0
        %284 = vmatprep.subr.mxu0 0.0
        %285 = vmatpush1.msra.mxu0 0.0
        %286 = vmatprep.subr.mxu0 0.0
        %287 = vmatpush1.msra.mxu0 0.0
        %288 = vmatprep.subr.mxu0 0.0
        %289 = vmatpush1.msra.mxu0 0.0
        %290 = vmatprep.subr.mxu0 0.0
        %291 = vmatpush1.msra.mxu0 0.0
        %292 = vmatprep.subr.mxu0 0.0
        %293 = vmatpush1.msra.mxu0 0.0
        %294 = vmatprep.subr.mxu0 0.0
        %295 = vmatpush1.msra.mxu0 0.0
        %296 = vmatprep.subr.mxu0 0.0
        %297 = vmatpush1.msra.mxu0 0.0
        %298 = vmatprep.subr.mxu0 0.0
        %299 = vmatpush1.msra.mxu0 0.0
        %300 = vmatprep.subr.mxu0 0.0
        %301 = vmatpush1.msra.mxu0 0.0
        %302 = vmatprep.subr.mxu0 0.0
        %303 = vmatpush1.msra.mxu0 0.0
        %304 = vmatprep.subr.mxu0 0.0
        %305 = vmatpush1.msra.mxu0 0.0
        %306 = vmatprep.subr.mxu0 0.0
        %307 = vmatpush1.msra.mxu0 0.0
        %308 = vmatprep.subr.mxu0 0.0
        %309 = vmatpush1.msra.mxu0 0.0
        %310 = vmatprep.subr.mxu0 0.0
        %311 = vmatpush1.msra.mxu0 0.0
        %312 = vmatprep.subr.mxu0 0.0
        %313 = vmatpush1.msra.mxu0 0.0
        %314 = vmatprep.subr.mxu0 0.0
        %315 = vmatpush1.msra.mxu0 0.0
        %316 = vmatprep.subr.mxu0 0.0
        %317 = vmatpush1.msra.mxu0 0.0
        %318 = vmatprep.subr.mxu0 0.0
        %319 = vmatpush1.msra.mxu0 0.0
        %320 = vmatprep.subr.mxu0 0.0
        %321 = vmatpush1.msra.mxu0 0.0
        %322 = vmatprep.subr.mxu0 0.0
        %323 = vmatpush1.msra.mxu0 0.0
        %324 = vmatprep.subr.mxu0 0.0
        %325 = vmatpush1.msra.mxu0 0.0
        %326 = vmatprep.mubr.f32.mxu0 0.0
        %327 = vmatmul.mubr.f32.gmra.mrb[0].mxu0 %v239
        %v328 = vpop.f32.mrb[0].mxu0
        %v329 = vadd.f32 0.0, %v328
        %v330 = vpop.f32.mrb[0].mxu0
        %v331 = vadd.f32 0.0, %v330
        %332 = vmatprep.mubr.f32.mxu0 0.0
        %333 = vmatmul.mubr.f32.gmra.mrb[0].mxu0 %v242
        %v334 = vpop.f32.mrb[0].mxu0
        %v335 = vadd.f32 0.0, %v334
        %v336 = vpop.f32.mrb[0].mxu0
        %v337 = vadd.f32 0.0, %v336
        %338 = vmatprep.mubr.f32.mxu0 0.0
        %339 = vmatmul.mubr.f32.gmra.mrb[0].mxu0 %v245
        %v340 = vpop.f32.mrb[0].mxu0
        %v341 = vadd.f32 0.0, %v340
        %v342 = vpop.f32.mrb[0].mxu0
        %v343 = vadd.f32 0.0, %v342
        %344 = vmatprep.mubr.f32.mxu0 0.0
        %345 = vmatmul.mubr.f32.gmra.mrb[0].mxu0 %v248
        %v346 = vpop.f32.mrb[0].mxu0
        %v347 = vadd.f32 0.0, %v346
        %v348 = vpop.f32.mrb[0].mxu0
        %v349 = vadd.f32 0.0, %v348
        %350 = vmatprep.mubr.f32.mxu0 0.0
        %351 = vmatmul.mubr.f32.gmra.mrb[0].mxu0 %v251
        %v352 = vpop.f32.mrb[0].mxu0
        %v353 = vadd.f32 0.0, %v352
        %v354 = vpop.f32.mrb[0].mxu0
        %v355 = vadd.f32 0.0, %v354
        %356 = vmatprep.mubr.f32.mxu0 0.0
        %357 = vmatmul.mubr.f32.gmra.mrb[0].mxu0 %v254
        %v358 = vpop.f32.mrb[0].mxu0
        %v359 = vadd.f32 0.0, %v358
        %v360 = vpop.f32.mrb[0].mxu0
        %v361 = vadd.f32 0.0, %v360
        %362 = vmatprep.mubr.f32.mxu0 0.0
        %363 = vmatmul.mubr.f32.gmra.mrb[0].mxu0 %v257
        %v364 = vpop.f32.mrb[0].mxu0
        %v365 = vadd.f32 0.0, %v364
        %v366 = vpop.f32.mrb[0].mxu0
        %v367 = vadd.f32 0.0, %v366
        %368 = vmatprep.mubr.f32.mxu0 0.0
        %369 = vmatmul.mubr.f32.gmra.mrb[0].mxu0 %v260
        %v370 = vpop.f32.mrb[0].mxu0
        %v371 = vadd.f32 0.0, %v370
        %v372 = vpop.f32.mrb[0].mxu0
        %v373 = vadd.f32 0.0, %v372
        %374 = vdwg.mxu0
        %v375 = vld [vmem:[%s2] sm:$0xff]
        %v376 = vld [vmem:[%s2 + $0x8] sm:$0xff]
        %v377 = vld [vmem:[%s3] sm:$0xff]
        %v378 = vld [vmem:[%s3 + $0x8] sm:$0xff]
        %v379 = vadd.f32 %v329, %v335
        %v380 = vrot.slane %v379, 4
        %v381 = vadd.f32 %v379, %v380
        %v382 = vrot.slane %v381, 2
        %v383 = vadd.f32 %v381, %v382
        %v384 = vrot.slane %v383, 1
        %v385 = vadd.f32 %v383, %v384
        %v386 = vadd.f32 %v331, %v337
        %v387 = vrot.slane %v386, 4
        %v388 = vadd.f32 %v386, %v387
        %v389 = vrot.slane %v388, 2
        %v390 = vadd.f32 %v388, %v389
        %v391 = vrot.slane %v390, 1
        %v392 = vadd.f32 %v390, %v391
        %v393 = vmul.f32 %v385, 0.0625
        %v394 = vmul.f32 %v392, 0.0625
        %v395 = vmul.f32 %v329, %v329
        %v396 = vmul.f32 %v331, %v331
        %v397 = vmul.f32 %v335, %v335
        %v398 = vmul.f32 %v337, %v337
        %v399 = vadd.f32 %v395, %v397
        %v400 = vrot.slane %v399, 4
        %v401 = vadd.f32 %v399, %v400
        %v402 = vrot.slane %v401, 2
        %v403 = vadd.f32 %v401, %v402
        %v404 = vrot.slane %v403, 1
        %v405 = vadd.f32 %v403, %v404
        %v406 = vadd.f32 %v396, %v398
        %v407 = vrot.slane %v406, 4
        %v408 = vadd.f32 %v406, %v407
        %v409 = vrot.slane %v408, 2
        %v410 = vadd.f32 %v408, %v409
        %v411 = vrot.slane %v410, 1
        %v412 = vadd.f32 %v410, %v411
        %v413 = vmul.f32 %v405, 0.0625
        %v414 = vmul.f32 %v412, 0.0625
        %v415 = vmul.f32 %v393, %v393
        %v416 = vmul.f32 %v394, %v394
        %v417 = vsub.f32 %v413, %v415
        %v418 = vsub.f32 %v414, %v416
        %v419 = vsub.f32 %v329, %v393
        %v420 = vsub.f32 %v331, %v394
        %v421 = vsub.f32 %v335, %v393
        %v422 = vsub.f32 %v337, %v394
        %v423 = vadd.f32 %v417, 1e-05
        %v424 = vadd.f32 %v418, 1e-05
        %v425 = vrsqrt.pop %v423
        %v426 = vrsqrt.pop %v424
        %v427 = vmul.f32 %v419, %v425
        %v428 = vmul.f32 %v420, %v426
        %v429 = vmul.f32 %v421, %v425
        %v430 = vmul.f32 %v422, %v426
        %432 = vset.pattern.permute.xlu0 0
        %433 = vperm.xlu0 %432, %v375
        %v434 = vpop.permute.xlu0 %433
        %437 = vset.pattern.permute.xlu0 0
        %438 = vperm.xlu0 %437, %v376
        %v439 = vpop.permute.xlu0 %438
        %v441 = vmul.f32 %v427, %v434
        %v442 = vmul.f32 %v428, %v434
        %v443 = vmul.f32 %v429, %v439
        %v444 = vmul.f32 %v430, %v439
        %446 = vset.pattern.permute.xlu0 0
        %447 = vperm.xlu0 %446, %v377
        %v448 = vpop.permute.xlu0 %447
        %451 = vset.pattern.permute.xlu0 0
        %452 = vperm.xlu0 %451, %v378
        %v453 = vpop.permute.xlu0 %452
        %v455 = vadd.f32 %v441, %v448
        %v456 = vadd.f32 %v442, %v448
        %v457 = vadd.f32 %v443, %v453
        %v458 = vadd.f32 %v444, %v453
        %v459 = vmax.f32 %v455, 0.0
        %v460 = vmax.f32 %v456, 0.0
        %v461 = vmax.f32 %v457, 0.0
        %v462 = vmax.f32 %v458, 0.0
        %463 = vst [vmem:[%s215] sm:$0xff] %v459
        %464 = vst [vmem:[%s215 + $0x8] sm:$0xff] %v460
        %465 = vst [vmem:[%s215 + $0x10] sm:$0xff] %v461
        %466 = vst [vmem:[%s215 + $0x18] sm:$0xff] %v462
        %v467 = vadd.f32 %v341, %v347
        %v468 = vrot.slane %v467, 4
        %v469 = vadd.f32 %v467, %v468
        %v470 = vrot.slane %v469, 2
        %v471 = vadd.f32 %v469, %v470
        %v472 = vrot.slane %v471, 1
        %v473 = vadd.f32 %v471, %v472
        %v474 = vadd.f32 %v343, %v349
        %v475 = vrot.slane %v474, 4
        %v476 = vadd.f32 %v474, %v475
        %v477 = vrot.slane %v476, 2
        %v478 = vadd.f32 %v476, %v477
        %v479 = vrot.slane %v478, 1
        %v480 = vadd.f32 %v478, %v479
        %v481 = vmul.f32 %v473, 0.0625
        %v482 = vmul.f32 %v480, 0.0625
        %v483 = vmul.f32 %v341, %v341
        %v484 = vmul.f32 %v343, %v343
        %v485 = vmul.f32 %v347, %v347
        %v486 = vmul.f32 %v349, %v349
        %v487 = vadd.f32 %v483, %v485
        %v488 = vrot.slane %v487, 4
        %v489 = vadd.f32 %v487, %v488
        %v490 = vrot.slane %v489, 2
        %v491 = vadd.f32 %v489, %v490
        %v492 = vrot.slane %v491, 1
        %v493 = vadd.f32 %v491, %v492
        %v494 = vadd.f32 %v484, %v486
        %v495 = vrot.slane %v494, 4
        %v496 = vadd.f32 %v494, %v495
        %v497 = vrot.slane %v496, 2
        %v498 = vadd.f32 %v496, %v497
        %v499 = vrot.slane %v498, 1
        %v500 = vadd.f32 %v498, %v499
        %v501 = vmul.f32 %v493, 0.0625
        %v502 = vmul.f32 %v500, 0.0625
        %v503 = vmul.f32 %v481, %v481
        %v504 = vmul.f32 %v482, %v482
        %v505 = vsub.f32 %v501, %v503
        %v506 = vsub.f32 %v502, %v504
        %v507 = vsub.f32 %v341, %v481
        %v508 = vsub.f32 %v343, %v482
        %v509 = vsub.f32 %v347, %v481
        %v510 = vsub.f32 %v349, %v482
        %v511 = vadd.f32 %v505, 1e-05
        %v512 = vadd.f32 %v506, 1e-05
        %v513 = vrsqrt.pop %v511
        %v514 = vrsqrt.pop %v512
        %v515 = vmul.f32 %v507, %v513
        %v516 = vmul.f32 %v508, %v514
        %v517 = vmul.f32 %v509, %v513
        %v518 = vmul.f32 %v510, %v514
        %v519 = vmul.f32 %v515, %v434
        %v520 = vmul.f32 %v516, %v434
        %v521 = vmul.f32 %v517, %v439
        %v522 = vmul.f32 %v518, %v439
        %v523 = vadd.f32 %v519, %v448
        %v524 = vadd.f32 %v520, %v448
        %v525 = vadd.f32 %v521, %v453
        %v526 = vadd.f32 %v522, %v453
        %v527 = vmax.f32 %v523, 0.0
        %v528 = vmax.f32 %v524, 0.0
        %v529 = vmax.f32 %v525, 0.0
        %v530 = vmax.f32 %v526, 0.0
        %531 = vst [vmem:[%s215 + $0x20] sm:$0xff] %v527
        %532 = vst [vmem:[%s215 + $0x28] sm:$0xff] %v528
        %533 = vst [vmem:[%s215 + $0x30] sm:$0xff] %v529
        %534 = vst [vmem:[%s215 + $0x38] sm:$0xff] %v530
        %v535 = vadd.f32 %v353, %v359
        %v536 = vrot.slane %v535, 4
        %v537 = vadd.f32 %v535, %v536
        %v538 = vrot.slane %v537, 2
        %v539 = vadd.f32 %v537, %v538
        %v540 = vrot.slane %v539, 1
        %v541 = vadd.f32 %v539, %v540
        %v542 = vadd.f32 %v355, %v361
        %v543 = vrot.slane %v542, 4
        %v544 = vadd.f32 %v542, %v543
        %v545 = vrot.slane %v544, 2
        %v546 = vadd.f32 %v544, %v545
        %v547 = vrot.slane %v546, 1
        %v548 = vadd.f32 %v546, %v547
        %v549 = vmul.f32 %v541, 0.0625
        %v550 = vmul.f32 %v548, 0.0625
        %v551 = vmul.f32 %v353, %v353
        %v552 = vmul.f32 %v355, %v355
        %v553 = vmul.f32 %v359, %v359
        %v554 = vmul.f32 %v361, %v361
        %v555 = vadd.f32 %v551, %v553
        %v556 = vrot.slane %v555, 4
        %v557 = vadd.f32 %v555, %v556
        %v558 = vrot.slane %v557, 2
        %v559 = vadd.f32 %v557, %v558
        %v560 = vrot.slane %v559, 1
        %v561 = vadd.f32 %v559, %v560
        %v562 = vadd.f32 %v552, %v554
        %v563 = vrot.slane %v562, 4
        %v564 = vadd.f32 %v562, %v563
        %v565 = vrot.slane %v564, 2
        %v566 = vadd.f32 %v564, %v565
        %v567 = vrot.slane %v566, 1
        %v568 = vadd.f32 %v566, %v567
        %v569 = vmul.f32 %v561, 0.0625
        %v570 = vmul.f32 %v568, 0.0625
        %v571 = vmul.f32 %v549, %v549
        %v572 = vmul.f32 %v550, %v550
        %v573 = vsub.f32 %v569, %v571
        %v574 = vsub.f32 %v570, %v572
        %v575 = vsub.f32 %v353, %v549
        %v576 = vsub.f32 %v355, %v550
        %v577 = vsub.f32 %v359, %v549
        %v578 = vsub.f32 %v361, %v550
        %v579 = vadd.f32 %v573, 1e-05
        %v580 = vadd.f32 %v574, 1e-05
        %v581 = vrsqrt.pop %v579
        %v582 = vrsqrt.pop %v580
        %v583 = vmul.f32 %v575, %v581
        %v584 = vmul.f32 %v576, %v582
        %v585 = vmul.f32 %v577, %v581
        %v586 = vmul.f32 %v578, %v582
        %v587 = vmul.f32 %v583, %v434
        %v588 = vmul.f32 %v584, %v434
        %v589 = vmul.f32 %v585, %v439
        %v590 = vmul.f32 %v586, %v439
        %v591 = vadd.f32 %v587, %v448
        %v592 = vadd.f32 %v588, %v448
        %v593 = vadd.f32 %v589, %v453
        %v594 = vadd.f32 %v590, %v453
        %v595 = vmax.f32 %v591, 0.0
        %v596 = vmax.f32 %v592, 0.0
        %v597 = vmax.f32 %v593, 0.0
        %v598 = vmax.f32 %v594, 0.0
        %599 = vst [vmem:[%s215 + $0x40] sm:$0xff] %v595
        %600 = vst [vmem:[%s215 + $0x48] sm:$0xff] %v596
        %601 = vst [vmem:[%s215 + $0x50] sm:$0xff] %v597
        %602 = vst [vmem:[%s215 + $0x58] sm:$0xff] %v598
        %v603 = vadd.f32 %v365, %v371
        %v604 = vrot.slane %v603, 4
        %v605 = vadd.f32 %v603, %v604
        %v606 = vrot.slane %v605, 2
        %v607 = vadd.f32 %v605, %v606
        %v608 = vrot.slane %v607, 1
        %v609 = vadd.f32 %v607, %v608
        %v610 = vadd.f32 %v367, %v373
        %v611 = vrot.slane %v610, 4
        %v612 = vadd.f32 %v610, %v611
        %v613 = vrot.slane %v612, 2
        %v614 = vadd.f32 %v612, %v613
        %v615 = vrot.slane %v614, 1
        %v616 = vadd.f32 %v614, %v615
        %v617 = vmul.f32 %v609, 0.0625
        %v618 = vmul.f32 %v616, 0.0625
        %v619 = vmul.f32 %v365, %v365
        %v620 = vmul.f32 %v367, %v367
        %v621 = vmul.f32 %v371, %v371
        %v622 = vmul.f32 %v373, %v373
        %v623 = vadd.f32 %v619, %v621
        %v624 = vrot.slane %v623, 4
        %v625 = vadd.f32 %v623, %v624
        %v626 = vrot.slane %v625, 2
        %v627 = vadd.f32 %v625, %v626
        %v628 = vrot.slane %v627, 1
        %v629 = vadd.f32 %v627, %v628
        %v630 = vadd.f32 %v620, %v622
        %v631 = vrot.slane %v630, 4
        %v632 = vadd.f32 %v630, %v631
        %v633 = vrot.slane %v632, 2
        %v634 = vadd.f32 %v632, %v633
        %v635 = vrot.slane %v634, 1
        %v636 = vadd.f32 %v634, %v635
        %v637 = vmul.f32 %v629, 0.0625
        %v638 = vmul.f32 %v636, 0.0625
        %v639 = vmul.f32 %v617, %v617
        %v640 = vmul.f32 %v618, %v618
        %v641 = vsub.f32 %v637, %v639
        %v642 = vsub.f32 %v638, %v640
        %v643 = vsub.f32 %v365, %v617
        %v644 = vsub.f32 %v367, %v618
        %v645 = vsub.f32 %v371, %v617
        %v646 = vsub.f32 %v373, %v618
        %v647 = vadd.f32 %v641, 1e-05
        %v648 = vadd.f32 %v642, 1e-05
        %v649 = vrsqrt.pop %v647
        %v650 = vrsqrt.pop %v648
        %v651 = vmul.f32 %v643, %v649
        %v652 = vmul.f32 %v644, %v650
        %v653 = vmul.f32 %v645, %v649
        %v654 = vmul.f32 %v646, %v650
        %v655 = vmul.f32 %v651, %v434
        %v656 = vmul.f32 %v652, %v434
        %v657 = vmul.f32 %v653, %v439
        %v658 = vmul.f32 %v654, %v439
        %v659 = vadd.f32 %v655, %v448
        %v660 = vadd.f32 %v656, %v448
        %v661 = vadd.f32 %v657, %v453
        %v662 = vadd.f32 %v658, %v453
        %v663 = vmax.f32 %v659, 0.0
        %v664 = vmax.f32 %v660, 0.0
        %v665 = vmax.f32 %v661, 0.0
        %v666 = vmax.f32 %v662, 0.0
        %667 = vst [vmem:[%s215 + $0x60] sm:$0xff] %v663
        %668 = vst [vmem:[%s215 + $0x68] sm:$0xff] %v664
        %669 = vst [vmem:[%s215 + $0x70] sm:$0xff] %v665
        %670 = vst [vmem:[%s215 + $0x78] sm:$0xff] %v666
        %s671 = sand.u32 %s131, 1
        %s672 = scalar_lea.sflag [#allocation3], %s671
        %s673 = sand.u32 %s131, 1
        %s674 = smul.addr %s673, 128
        %s675 = scalar_lea.vmem [#allocation2], %s674
        // Predicated region
        $region37: #{tpu_custom_call.1} parent=35 // pred_check
          %p676 = pneg %p141
        $region38: #{tpu_custom_call.1} parent=35 // pred_check_branch
          %678 = sbr.rel (%p676) target = $region40
        $region39: #{tpu_custom_call.1} parent=35 // pred_region
          %s679 = smul.u32 2, %s23
          %s681 = ssub.s32 2048, 2048
          %682 = vsyncadd %s672, %s681
          %s683 = smul.addr %s22, 16
          %s684 = sadd.s32 %s679, %s683
          %s685 = smul.addr %s684, 128
          %s686 = scalar_lea.hbm %s4, %s685
          %s687 = sshll.u32 %s675, 4
          %s688 = int_to_ptr.vmem [resolvable:$true] %s687
          %693 = dma.vmem_to_hbm [thread:$0]  %s688, 2048, %s686, %s672, 256, 256, 16
        $region40: #{tpu_custom_call.1} parent=35 // pred_fallthru
          _
      $region36: #{tpu_custom_call.1} parent=5 // pred_fallthru
        _
      %p694 = scmp.le.s32.totalorder 2, %s13
      // Predicated region
      $region41: #{tpu_custom_call.1} parent=5 // pred_check
        %p695 = pneg %p694
      $region42: #{tpu_custom_call.1} parent=5 // pred_check_branch
        %697 = sbr.rel (%p695) target = $region44
      $region43: #{tpu_custom_call.1} parent=5 // pred_region
        %s698 = ssub.s32 %s13, 2
        // Predicated region
        $region45: #{tpu_custom_call.1} parent=43 // pred_check
          %p699 = pneg %p147
        $region46: #{tpu_custom_call.1} parent=43 // pred_check_branch
          %701 = sbr.rel (%p699) target = $region48
        $region47: #{tpu_custom_call.1} parent=43 // pred_region
          %s702 = sand.u32 %s132, 1
          %s703 = scalar_lea.sflag [#allocation3], %s702
          %s704 = sand.u32 %s132, 1
          %s705 = smul.addr %s704, 128
          %s706 = scalar_lea.vmem [#allocation2], %s705
          %707 = dma.done %s703, 2048
        $region48: #{tpu_custom_call.1} parent=43 // pred_fallthru
          _
      $region44: #{tpu_custom_call.1} parent=5 // pred_fallthru
        _
    $region6: #{tpu_custom_call.1} parent=1 // loop_footer
      %s17 = sadd.s32 1, %s13
    $region7: #{tpu_custom_call.1} parent=1 // loop_footer_branch
      %12 = sbr.rel target = $region3
    $region8: #{tpu_custom_call.1} parent=1 // loop_exit
      _
    %708 = vsyncpa [#allocation3], 1
    %s709 = scalar_lea.sflag [#allocation3], 1
    %710 = vsyncpa %s709, 1

</llo_original>
